<compile_context>
chip_gen: v6e
topology: v6e:2x2x1
jax: 0.10.0
libtpu: 0.0.40
codegen_flags: <defaults>
</compile_context>

<pallas_src>
import jax
import jax.numpy as jnp
from jax.experimental import pallas as pl
from jax.experimental.pallas import tpu as pltpu


def _lambda_kernel(x_ref, y_ref, o_ref):
    # Blocks are (tile_b, D): batch rows on sublanes, features on lanes.
    d = x_ref[...] - y_ref[...]                        # native dtype (no upcast on load)
    d32 = d.astype(jnp.float32)                        # accumulate in f32
    ssum = jnp.sum(d32 * d32, axis=1, keepdims=True)   # (tile_b, 1) lane reduce (XLU)
    o_ref[...] = jnp.exp(-ssum).astype(o_ref.dtype)    # exp on EUP


def _round_up(v, m):
    return ((v + m - 1) // m) * m


def _choose_tile_b(B, D, itemsize):
    """Pick a batch tile (multiple of 8 sublanes) targeting ~4 MiB per input
    block while keeping 2 inputs x 2 pipeline buffers + f32 temporaries under
    ~16 MiB of VMEM (safe on v5e/v6e/v7x scoped defaults).  Narrow feature
    dims are lane-padded to 128 in VMEM, so budget with the padded width."""
    d_lanes = _round_up(D, 128)
    per_row = 2 * 2 * d_lanes * itemsize + 2 * d_lanes * 4   # 2in x 2buf + 2 f32 temps
    budget = 16 * 1024 * 1024
    target_block = 4 * 1024 * 1024
    tb = min(target_block // max(1, d_lanes * itemsize), budget // per_row)
    tb = max(8, (tb // 8) * 8)
    return int(min(tb, _round_up(B, 8)))


def lambda_model_forward(x, y, *, tile_b=None):
    """out[b] = exp(-sum_d (x[b,d]-y[b,d])^2), computed with a Pallas TPU kernel."""
    assert x.shape == y.shape and x.ndim == 2
    B, D = x.shape
    itemsize = jnp.dtype(x.dtype).itemsize

    if tile_b is None:
        tile_b = _choose_tile_b(B, D, itemsize)

    if B <= tile_b:
        tile_b = B                          # single step; block == full dims (always legal)
    else:
        tile_b = max(8, (tile_b // 8) * 8)  # sublane tile must be a multiple of 8

    # Trailing partial block (B % tile_b != 0) is read-padded / write-masked by Pallas.
    num_steps = pl.cdiv(B, tile_b)

    # Explicit VMEM budget from the tile footprint (lane-padded for narrow D).
    d_lanes = _round_up(D, 128)
    block_in_vmem = _round_up(tile_b, 8) * d_lanes * itemsize
    block_f32_vmem = _round_up(tile_b, 8) * d_lanes * 4
    vmem_limit = 2 * 2 * block_in_vmem + 2 * block_f32_vmem + (4 << 20)
    vmem_limit = int(min(max(vmem_limit, 16 << 20), 32 << 20))

    cost = pl.CostEstimate(
        flops=3 * B * D,
        transcendentals=B,
        bytes_accessed=2 * B * D * itemsize + B * 4,
    )

    out = pl.pallas_call(
        _lambda_kernel,
        out_shape=jax.ShapeDtypeStruct((B, 1), jnp.float32),
        grid_spec=pltpu.PrefetchScalarGridSpec(
            num_scalar_prefetch=0,
            grid=(num_steps,),
            in_specs=[
                pl.BlockSpec((tile_b, D), lambda i: (i, 0)),
                pl.BlockSpec((tile_b, D), lambda i: (i, 0)),
            ],
            out_specs=pl.BlockSpec((tile_b, 1), lambda i: (i, 0)),
        ),
        compiler_params=pltpu.CompilerParams(
            dimension_semantics=("parallel",),
            vmem_limit_bytes=vmem_limit,
        ),
        cost_estimate=cost,
    )(x, y)

    return out[:, 0]  # squeeze -> [batch], matching torch's dim=1 reduce


if __name__ == "__main__":
    key = jax.random.PRNGKey(0)
    kx, ky = jax.random.split(key)

    # Small demo shapes consistent with the LTN lambda (batch, hidden features).
    batch, hidden = 8, 32
    x = jax.random.normal(kx, (batch, hidden), dtype=jnp.float32)
    y = jax.random.normal(ky, (batch, hidden), dtype=jnp.float32)

    out = lambda_model_forward(x, y)
    jax.block_until_ready(out)

    ref = jnp.exp(-jnp.sum((x - y) ** 2, axis=1))
    assert out.shape == (batch,)
    assert jnp.allclose(out, ref, atol=1e-5, rtol=1e-5)

    # Multi-step grid with a ragged (masked) trailing block: 600 = 2*256 + 88.
    batch2, hidden2 = 600, 32
    x2 = jax.random.normal(kx, (batch2, hidden2), dtype=jnp.float32)
    y2 = jax.random.normal(ky, (batch2, hidden2), dtype=jnp.float32)
    out2 = lambda_model_forward(x2, y2, tile_b=256)
    jax.block_until_ready(out2)
    ref2 = jnp.exp(-jnp.sum((x2 - y2) ** 2, axis=1))
    assert out2.shape == (batch2,)
    assert jnp.allclose(out2, ref2, atol=1e-5, rtol=1e-5)

    print("KERNEL_OK")
</pallas_src>

<mosaic_0001>
module attributes {stable_mosaic.version = 11 : i64} {
  func.func @_lambda_kernel(%arg0: i32, %arg1: memref<8x32xf32, #tpu.memory_space<vmem>>, %arg2: memref<8x32xf32, #tpu.memory_space<vmem>>, %arg3: memref<8x1xf32, #tpu.memory_space<vmem>>) attributes {dimension_semantics = [#tpu.dimension_semantics<parallel>], iteration_bounds = array<i64: 1>, scalar_prefetch = 0 : i64, scratch_operands = 0 : i64, tpu.core_type = #tpu.core_type<tc>, window_params = [{transform_indices = @transform_0, window_bounds = array<i64: 8, 32>}, {transform_indices = @transform_1, window_bounds = array<i64: 8, 32>}, {transform_indices = @transform_2, window_bounds = array<i64: 8, 1>}]} {
    %c0 = arith.constant 0 : index
    %c0_0 = arith.constant 0 : index
    %0 = vector.load %arg1[%c0, %c0_0] : memref<8x32xf32, #tpu.memory_space<vmem>>, vector<8x32xf32>
    %c0_1 = arith.constant 0 : index
    %c0_2 = arith.constant 0 : index
    %1 = vector.load %arg2[%c0_1, %c0_2] : memref<8x32xf32, #tpu.memory_space<vmem>>, vector<8x32xf32>
    %2 = arith.subf %0, %1 : vector<8x32xf32>
    %3 = arith.mulf %2, %2 : vector<8x32xf32>
    %cst = arith.constant dense<0.000000e+00> : vector<8xf32>
    %4 = vector.multi_reduction <add>, %3, %cst [1] : vector<8x32xf32> to vector<8xf32>
    %5 = vector.shape_cast %4 : vector<8xf32> to vector<8x1xf32>
    %cst_3 = arith.constant 0.000000e+00 : f32
    %6 = vector.broadcast %cst_3 : f32 to vector<8x1xf32>
    %7 = arith.subf %6, %5 : vector<8x1xf32>
    %8 = math.exp %7 : vector<8x1xf32>
    %c0_4 = arith.constant 0 : index
    %c0_5 = arith.constant 0 : index
    %9 = vector.load %arg3[%c0_4, %c0_5] : memref<8x1xf32, #tpu.memory_space<vmem>>, vector<8x1xf32>
    tpu.vector_store %arg3[%c0_4, %c0_5], %8 {strides = array<i32>} : memref<8x1xf32, #tpu.memory_space<vmem>>, vector<8x1xf32>,
    return
  }
  func.func @transform_0(%arg0: i32) -> (i32, i32) {
    %c0_i32 = arith.constant 0 : i32
    %c0_i32_0 = arith.constant 0 : i32
    return %arg0, %c0_i32 : i32, i32
  }
  func.func @transform_1(%arg0: i32) -> (i32, i32) {
    %c0_i32 = arith.constant 0 : i32
    %c0_i32_0 = arith.constant 0 : i32
    return %arg0, %c0_i32 : i32, i32
  }
  func.func @transform_2(%arg0: i32) -> (i32, i32) {
    %c0_i32 = arith.constant 0 : i32
    %c0_i32_0 = arith.constant 0 : i32
    return %arg0, %c0_i32 : i32, i32
  }
}

</mosaic_0001>

<llo_original>
// kernel: tpu_custom_call.1
$region0: #{tpu_custom_call.1}
  #allocation0 [shape = 'u32[]', space=smem, size = 0x4, offset = 0x4, fixed_abs, tag = 'smem constant byte address 0x4 - core index']
  #allocation1 [shape = 'u32[144,128]{1,0:T(1,128)}', space=vmem, size = 0x12000, scoped, tag = 'internal scratch']
  %s0 = inlined_call_operand.hbm [shape: f32[8,32], index: 0, kind: input, shape index: {}]
  %s1 = inlined_call_operand.hbm [shape: f32[8,32], index: 1, kind: input, shape index: {}]
  %s2 = inlined_call_operand.vmem [shape: f32[8,1], index: 2, kind: output, shape index: {}]
  %s3 = sld [smem:[#allocation0]]
  $region26: #{tpu_custom_call.1} parent=0
    _
  %s5 = ssub.s32 1, %s3
  %s6 = scalar_select 0, %s5, %s3
  $region1: #{tpu_custom_call.1} parent=0
    #allocation2 [shape = 'u8[4096]{0}', space=vmem, size = 0x1000, scoped, tag = 'input window, operand 0, single buffered']
    #allocation3 [shape = 's32[1]{0}', space=sflag, size = 0x4, scoped, tag = 'scoped memory for tpu_custom_call.1']
    #allocation4 [shape = 'u8[4096]{0}', space=vmem, size = 0x1000, scoped, tag = 'input window, operand 1, single buffered']
    #allocation5 [shape = 's32[1]{0}', space=sflag, size = 0x4, scoped, tag = 'scoped memory for tpu_custom_call.1']
    %7 = vsyncpa [#allocation3], 0
    %8 = vsyncpa [#allocation5], 0
    // Predicated region
    $region2: #{tpu_custom_call.1} parent=1 // pred_check
      _
    $region3: #{tpu_custom_call.1} parent=1 // pred_check_branch
      %10 = sbr.rel (0) target = $region5
    $region4: #{tpu_custom_call.1} parent=1 // pred_region
      %s12 = ssub.s32 128, 128
      %13 = vsyncadd [#allocation3], %s12
      %s15 = sshll.u32 [#allocation2], 4
      %s16 = int_to_ptr.vmem [resolvable:$true] %s15
      %18 = dma.hbm_to_vmem [thread:$0]  %s0, 128, %s16, [#allocation3]
    $region5: #{tpu_custom_call.1} parent=1 // pred_fallthru
      _
    // Predicated region
    $region6: #{tpu_custom_call.1} parent=1 // pred_check
      _
    $region7: #{tpu_custom_call.1} parent=1 // pred_check_branch
      %20 = sbr.rel (0) target = $region9
    $region8: #{tpu_custom_call.1} parent=1 // pred_region
      %s22 = ssub.s32 128, 128
      %23 = vsyncadd [#allocation5], %s22
      %s25 = sshll.u32 [#allocation4], 4
      %s26 = int_to_ptr.vmem [resolvable:$true] %s25
      %28 = dma.hbm_to_vmem [thread:$0]  %s1, 128, %s26, [#allocation5]
    $region9: #{tpu_custom_call.1} parent=1 // pred_fallthru
      _
    // Predicated region
    $region10: #{tpu_custom_call.1} parent=1 // pred_check
      _
    $region11: #{tpu_custom_call.1} parent=1 // pred_check_branch
      %30 = sbr.rel (0) target = $region13
    $region12: #{tpu_custom_call.1} parent=1 // pred_region
      %31 = dma.done [#allocation3], 128
    $region13: #{tpu_custom_call.1} parent=1 // pred_fallthru
      _
    // Predicated region
    $region14: #{tpu_custom_call.1} parent=1 // pred_check
      _
    $region15: #{tpu_custom_call.1} parent=1 // pred_check_branch
      %33 = sbr.rel (0) target = $region17
    $region16: #{tpu_custom_call.1} parent=1 // pred_region
      %34 = dma.done [#allocation5], 128
    $region17: #{tpu_custom_call.1} parent=1 // pred_fallthru
      _
    %v35 = vld [vmem:[#allocation2] sm:$0xff]
    %v36 = vld [vmem:[#allocation4] sm:$0xff]
    %v37 = vsub.f32 %v35, %v36
    %v38 = vmul.f32 %v37, %v37
    %vm39 = vcmask 261120
    %v40 = vsel %vm39, %v38, 0.0
    %41 = vadd.xlane.f32.xlu0 %v40
    %v42 = vpop.xlane.xlu0 %41
    %v43 = vsub.f32 0.0, %v42
    %v44 = vmul.f32 %v43, 1.442695
    %v45 = vpow.pop %v44
    %vm46 = vcmask 7168
    %47 = vst.msk [vmem:[%s2] sm:$0xff] %vm46, %v45
    // Predicated region
    $region18: #{tpu_custom_call.1} parent=1 // pred_check
      _
    $region19: #{tpu_custom_call.1} parent=1 // pred_check_branch
      %49 = sbr.rel (0) target = $region21
    $region20: #{tpu_custom_call.1} parent=1 // pred_region
      _
    $region21: #{tpu_custom_call.1} parent=1 // pred_fallthru
      _
    // Predicated region
    $region22: #{tpu_custom_call.1} parent=1 // pred_check
      _
    $region23: #{tpu_custom_call.1} parent=1 // pred_check_branch
      %51 = sbr.rel (0) target = $region25
    $region24: #{tpu_custom_call.1} parent=1 // pred_region
      _
    $region25: #{tpu_custom_call.1} parent=1 // pred_fallthru
      _
    %52 = vsyncpa [#allocation3], 1
    %53 = vsyncpa [#allocation5], 1

</llo_original>
